<compile_context>
chip_gen: v5e
topology: v5e:2x2
jax: 0.10.0
libtpu: 0.0.40
codegen_flags: <defaults>
</compile_context>

<pallas_src>
import jax
import jax.numpy as jnp
from jax.experimental import pallas as pl
from jax.experimental.pallas import tpu as pltpu

IMAGENET_MEAN = (0.485, 0.456, 0.406)
IMAGENET_STD = (0.229, 0.224, 0.225)


# ----------------------------------------------------------------------------
# Glue: bilinear interpolation matrix (matches torch.nn.functional.interpolate
# with mode="bilinear", align_corners=False, antialias=False — i.e. the
# exportable Resize used by anomalib's get_exportable_transform).
# Each row has exactly two non-zeros that sum to 1.
# TODO(synk): for very large downscale ratios (Hi >> Ho) a 2-tap gather
# formulation (scalar-prefetched i0/i1/w tables) would avoid the O(Hi) dense
# MACs per output row; dense bf16 is fine while the kernel stays mem-bound.
# ----------------------------------------------------------------------------
def bilinear_matrix(out_size: int, in_size: int) -> jnp.ndarray:
    scale = in_size / out_size
    dst = jnp.arange(out_size, dtype=jnp.float32)
    src = (dst + 0.5) * scale - 0.5
    src = jnp.maximum(src, 0.0)                      # PyTorch clamps negatives to 0
    i0 = jnp.floor(src).astype(jnp.int32)
    i0 = jnp.minimum(i0, in_size - 1)
    i1 = jnp.minimum(i0 + 1, in_size - 1)
    w1 = src - i0.astype(jnp.float32)
    w0 = 1.0 - w1
    m = jnp.zeros((out_size, in_size), dtype=jnp.float32)
    rows = jnp.arange(out_size)
    m = m.at[rows, i0].add(w0)
    m = m.at[rows, i1].add(w1)
    return m


# ----------------------------------------------------------------------------
# Pallas kernel: resize (two MXU contractions, bf16 operands / f32 accum) +
# fused per-channel normalize with scalar constants (no tensor operands).
# ----------------------------------------------------------------------------
def _make_kernel(scale_consts, shift_consts, compute_dtype):
    scale_consts = tuple(float(s) for s in scale_consts)
    shift_consts = tuple(float(s) for s in shift_consts)

    def kernel(x_ref, wh_ref, wwt_ref, o_ref):
        # x_ref:   (nb, C, Hi, Wi)    input block (native dtype)
        # wh_ref:  (Ho_t, Hi)         height interpolation block (compute_dtype)
        # wwt_ref: (Wi, Wo)           width interpolation (pre-transposed)
        # o_ref:   (nb, C, Ho_t, Wo)
        nb, C, Hi, Wi = x_ref.shape
        ho_t = wh_ref.shape[0]
        Wo = wwt_ref.shape[1]

        # Width contraction FIRST: one large lane-dense 2-D MXU matmul with the
        # batch/channel/height dims folded into the rows.  bf16 operands,
        # f32 accumulation.
        x = x_ref[...].astype(compute_dtype).reshape(nb * C * Hi, Wi)
        t = jnp.dot(x, wwt_ref[...], preferred_element_type=jnp.float32)
        t = t.astype(compute_dtype).reshape(nb * C, Hi, Wo)

        # Height contraction, batched over nb*C images*channels.  Running it
        # second means any dot_general result relayout only touches the
        # output-sized (nb*C, ho_t, Wo) buffer, not the Wi-wide intermediate.
        r = jnp.einsum("oh,bhw->bow", wh_ref[...], t,
                       preferred_element_type=jnp.float32)
        r = r.reshape(nb, C, ho_t, Wo)

        # Fused Normalize: per-channel scalar multiply-add (VPU work hidden
        # under the MXU slot).  Each store is a full lane-dense (nb, ho_t, Wo)
        # slab sliced only along major dims.
        # TODO(synk): a single full-block store against (1, C, 1, 1) constant
        # scale/shift arrays would save C-1 store issues, but non-splat vector
        # constants varying along a major dim are a fragile Mosaic lowering
        # path; kept the proven per-channel scalar form (kernel is MXU/HBM
        # bound either way).
        for c in range(C):
            o_ref[:, c] = (r[:, c] * scale_consts[c]
                           + shift_consts[c]).astype(o_ref.dtype)

    return kernel


def _tpu_vmem_capacity_bytes():
    try:
        return int(pltpu.get_tpu_info().vmem_capacity_bytes)
    except Exception:
        return 64 * 1024 * 1024   # conservative fallback (v7x-sized VMEM)


def _pick_block(N, C, Hi, Wi, Ho, Wo, in_isz, out_isz, cdt_isz, budget, two_cores):
    """Choose (images per step, output-row tile) from a per-step VMEM budget."""
    def block_bytes(nb, ho_t):
        imgs = nb * C
        return (2 * imgs * Hi * Wi * in_isz          # double-buffered input block
                + imgs * Hi * Wi * cdt_isz           # compute-dtype cast of input
                + imgs * Hi * Wo * 4                 # f32 width-contraction result
                + imgs * Hi * Wo * cdt_isz           # compute-dtype copy of it
                + imgs * ho_t * Wo * 4               # f32 height-contraction result
                + 2 * imgs * ho_t * Wo * out_isz     # double-buffered output block
                + 2 * (ho_t * Hi + Wi * Wo) * cdt_isz)  # double-buffered weights

    if block_bytes(1, Ho) <= budget:
        # Whole images fit: pack as many per step as the budget allows.
        w_bytes = 2 * (Ho * Hi + Wi * Wo) * cdt_isz
        per_img = max(block_bytes(1, Ho) - w_bytes, 1)
        nb = max(1, min(N, (budget - w_bytes) // per_img))
        ho_t = Ho
        # Keep >= 2 grid steps only on 2-TensorCore parts (v7x) so both cores
        # get work; on single-TC parts it would just halve the block for free.
        if two_cores and N > 1:
            nb = min(nb, pl.cdiv(N, 2))
    else:
        # Spatial fallback: one image per step, tile output rows (mult. of 8).
        nb = 1
        ho_t = max(8, (Ho // 2 + 7) // 8 * 8)
        while ho_t > 8 and block_bytes(1, ho_t) > budget:
            ho_t = max(8, (ho_t // 2 + 7) // 8 * 8)
        ho_t = min(ho_t, Ho)
        # TODO(synk): if even ho_t=8 exceeds the budget (gigantic Hi*Wi), an
        # additional input-row (Hi) tiling pass would be needed.
    return nb, ho_t


def pre_processor_forward(x, out_hw=(256, 256),
                          mean=IMAGENET_MEAN, std=IMAGENET_STD,
                          input_scale=1.0,
                          out_dtype=jnp.float32,
                          compute_dtype=jnp.bfloat16):
    """Pallas equivalent of PreProcessor.forward with the canonical
    Resize(bilinear) + Normalize exportable transform (layout: NCHW).

    - For uint8 inputs pass input_scale=1/255 (folded into the normalization).
    - Pass out_dtype=jnp.bfloat16 to halve the output writeback when the
      consumer accepts bf16 (kernel is HBM-bound once the MXU runs bf16).
    - compute_dtype=jnp.float32 gives a bit-accurate reference mode.
    """
    N, C, Hi, Wi = x.shape
    Ho, Wo = out_hw
    if len(mean) != C or len(std) != C:
        raise ValueError(f"mean/std must have length C={C}")

    wh = bilinear_matrix(Ho, Hi).astype(compute_dtype)       # (Ho, Hi)
    ww_t = bilinear_matrix(Wo, Wi).T.astype(compute_dtype)   # (Wi, Wo), pre-transposed

    # Normalize folded to a per-channel affine: out = r*scale_c + shift_c,
    # with the input_scale (e.g. 1/255 for uint8) absorbed into scale_c.
    scale_c = [float(input_scale) / float(s) for s in std]
    shift_c = [-float(m) / float(s) for m, s in zip(mean, std)]

    # Generation-aware VMEM budgeting (v7x: 64 MiB physical, 2 TensorCores;
    # v5e/v6e/v5p: 128 MiB, 1 TensorCore).
    vmem_cap = _tpu_vmem_capacity_bytes()
    if vmem_cap >= 120 * 1024 * 1024:
        block_budget, vmem_limit, two_cores = 40 << 20, 100 << 20, False
    else:
        block_budget, vmem_limit, two_cores = 20 << 20, 48 << 20, True

    in_isz = jnp.dtype(x.dtype).itemsize
    out_isz = jnp.dtype(out_dtype).itemsize
    cdt_isz = jnp.dtype(compute_dtype).itemsize
    nb, ho_t = _pick_block(N, C, Hi, Wi, Ho, Wo, in_isz, out_isz, cdt_isz,
                           block_budget, two_cores)

    grid = (pl.cdiv(N, nb), pl.cdiv(Ho, ho_t))

    grid_spec = pltpu.PrefetchScalarGridSpec(
        num_scalar_prefetch=0,
        grid=grid,
        in_specs=[
            # Input block index is constant along the (inner) Ho axis, so the
            # input DMA is not re-issued per output-row tile.
            pl.BlockSpec((nb, C, Hi, Wi), lambda i, j: (i, 0, 0, 0)),
            pl.BlockSpec((ho_t, Hi), lambda i, j: (j, 0)),
            # Constant block index -> the width-weight DMA is not re-issued.
            # TODO(synk): pipeline_mode=pl.Buffered(1) would single-buffer the
            # constant weights and save a little VMEM on v7x.
            pl.BlockSpec((Wi, Wo), lambda i, j: (0, 0)),
        ],
        out_specs=pl.BlockSpec((nb, C, ho_t, Wo), lambda i, j: (i, 0, j, 0)),
    )

    return pl.pallas_call(
        _make_kernel(scale_c, shift_c, compute_dtype),
        out_shape=jax.ShapeDtypeStruct((N, C, Ho, Wo), out_dtype),
        grid_spec=grid_spec,
        compiler_params=pltpu.CompilerParams(
            dimension_semantics=("parallel", "arbitrary"),
            vmem_limit_bytes=vmem_limit,
        ),
    )(x, wh, ww_t)


# Pure-JAX f32 reference (resize, then normalize — PyTorch order) for sanity.
def _reference(x, out_hw, mean=IMAGENET_MEAN, std=IMAGENET_STD, input_scale=1.0):
    Ho, Wo = out_hw
    Hi, Wi = x.shape[-2:]
    wh = bilinear_matrix(Ho, Hi)
    ww = bilinear_matrix(Wo, Wi)
    r = jnp.einsum("oh,nchw,pw->ncop", wh, x.astype(jnp.float32), ww) * input_scale
    m = jnp.asarray(mean, jnp.float32)[None, :, None, None]
    s = jnp.asarray(std, jnp.float32)[None, :, None, None]
    return (r - m) / s


if __name__ == "__main__":
    key = jax.random.PRNGKey(0)
    # Small NCHW image batch consistent with the module's image-transform use
    # (3 channels to match the ImageNet mean/std of the canonical transform).
    x = jax.random.uniform(key, (2, 3, 16, 16), dtype=jnp.float32)

    out = pre_processor_forward(x, out_hw=(32, 32))
    out = jax.block_until_ready(out)

    ref = _reference(x, out_hw=(32, 32))
    assert out.shape == (2, 3, 32, 32)
    # bf16 MXU operands with f32 accumulation: tolerance loosened accordingly.
    err = float(jnp.max(jnp.abs(out - ref)))
    assert jnp.allclose(out, ref, atol=5e-2, rtol=0.0), err

    print("KERNEL_OK")
</pallas_src>

<mosaic_0001>
module attributes {stable_mosaic.version = 11 : i64} {
  func.func @kernel(%arg0: i32, %arg1: i32, %arg2: memref<1x3x16x16xf32, #tpu.memory_space<vmem>>, %arg3: memref<32x16xbf16, #tpu.memory_space<vmem>>, %arg4: memref<16x32xbf16, #tpu.memory_space<vmem>>, %arg5: memref<1x3x32x32xf32, #tpu.memory_space<vmem>>) attributes {dimension_semantics = [#tpu.dimension_semantics<parallel>, #tpu.dimension_semantics<arbitrary>], iteration_bounds = array<i64: 2, 1>, scalar_prefetch = 0 : i64, scratch_operands = 0 : i64, tpu.core_type = #tpu.core_type<tc>, window_params = [{transform_indices = @transform_0, window_bounds = array<i64: 1, 3, 16, 16>}, {transform_indices = @transform_1, window_bounds = array<i64: 32, 16>}, {pipeline_mode = #tpu.pipeline_mode<synchronous>, transform_indices = @transform_2, window_bounds = array<i64: 16, 32>}, {transform_indices = @transform_3, window_bounds = array<i64: 1, 3, 32, 32>}]} {
    %c0 = arith.constant 0 : index
    %c0_0 = arith.constant 0 : index
    %c0_1 = arith.constant 0 : index
    %c0_2 = arith.constant 0 : index
    %0 = vector.load %arg2[%c0, %c0_0, %c0_1, %c0_2] : memref<1x3x16x16xf32, #tpu.memory_space<vmem>>, vector<1x3x16x16xf32>
    %1 = arith.truncf %0 : vector<1x3x16x16xf32> to vector<1x3x16x16xbf16>
    %2 = vector.shape_cast %1 : vector<1x3x16x16xbf16> to vector<48x16xbf16>
    %c0_3 = arith.constant 0 : index
    %c0_4 = arith.constant 0 : index
    %3 = vector.load %arg4[%c0_3, %c0_4] : memref<16x32xbf16, #tpu.memory_space<vmem>>, vector<16x32xbf16>
    %cst = arith.constant dense<0.000000e+00> : vector<48x32xf32>
    %4 = tpu.matmul %2, %3, %cst {dimension_numbers = #tpu.dot_dimension_numbers<[1], [0], [0], [1], [0, 0, 1, 1], [], []>} : vector<48x16xbf16>, vector<16x32xbf16>, vector<48x32xf32> -> vector<48x32xf32>
    %5 = arith.truncf %4 : vector<48x32xf32> to vector<48x32xbf16>
    %6 = vector.shape_cast %5 : vector<48x32xbf16> to vector<3x16x32xbf16>
    %c0_5 = arith.constant 0 : index
    %c0_6 = arith.constant 0 : index
    %7 = vector.load %arg3[%c0_5, %c0_6] : memref<32x16xbf16, #tpu.memory_space<vmem>>, vector<32x16xbf16>
    "tpu.trace_start"() <{level = 10 : i32, message = "oh,bhw->bow"}> : () -> ()
    %cst_7 = arith.constant dense<0.000000e+00> : vector<3x32x32xf32>
    %8 = tpu.matmul %6, %7, %cst_7 {dimension_numbers = #tpu.dot_dimension_numbers<[1], [1], [0, 2], [0], [0, 0, 0, 2, 1, 0], [], []>} : vector<3x16x32xbf16>, vector<32x16xbf16>, vector<3x32x32xf32> -> vector<3x32x32xf32>
    %9 = tpu.transpose %8, [0, 2, 1] : vector<3x32x32xf32> -> vector<3x32x32xf32>
    "tpu.trace_stop"() : () -> ()
    %10 = vector.shape_cast %9 : vector<3x32x32xf32> to vector<1x3x32x32xf32>
    %11 = vector.extract_strided_slice %10 {offsets = [0, 0, 0, 0], sizes = [1, 1, 32, 32], strides = [1, 1, 1, 1]} : vector<1x3x32x32xf32> to vector<1x1x32x32xf32>
    %12 = vector.shape_cast %11 : vector<1x1x32x32xf32> to vector<1x32x32xf32>
    %cst_8 = arith.constant 4.36681223 : f32
    %13 = vector.broadcast %cst_8 : f32 to vector<1x32x32xf32>
    %14 = arith.mulf %12, %13 : vector<1x32x32xf32>
    %cst_9 = arith.constant -2.11790395 : f32
    %15 = vector.broadcast %cst_9 : f32 to vector<1x32x32xf32>
    %16 = arith.addf %14, %15 : vector<1x32x32xf32>
    %c0_10 = arith.constant 0 : index
    %c0_11 = arith.constant 0 : index
    %c0_12 = arith.constant 0 : index
    %c0_13 = arith.constant 0 : index
    %17 = vector.load %arg5[%c0_10, %c0_11, %c0_12, %c0_13] : memref<1x3x32x32xf32, #tpu.memory_space<vmem>>, vector<1x1x32x32xf32>
    %18 = vector.shape_cast %17 : vector<1x1x32x32xf32> to vector<1x32x32xf32>
    %19 = vector.shape_cast %16 : vector<1x32x32xf32> to vector<1x1x32x32xf32>
    tpu.vector_store %arg5[%c0_10, %c0_11, %c0_12, %c0_13], %19 {strides = array<i32>} : memref<1x3x32x32xf32, #tpu.memory_space<vmem>>, vector<1x1x32x32xf32>,
    %20 = vector.extract_strided_slice %10 {offsets = [0, 1, 0, 0], sizes = [1, 1, 32, 32], strides = [1, 1, 1, 1]} : vector<1x3x32x32xf32> to vector<1x1x32x32xf32>
    %21 = vector.shape_cast %20 : vector<1x1x32x32xf32> to vector<1x32x32xf32>
    %cst_14 = arith.constant 4.46428585 : f32
    %22 = vector.broadcast %cst_14 : f32 to vector<1x32x32xf32>
    %23 = arith.mulf %21, %22 : vector<1x32x32xf32>
    %cst_15 = arith.constant -2.03571439 : f32
    %24 = vector.broadcast %cst_15 : f32 to vector<1x32x32xf32>
    %25 = arith.addf %23, %24 : vector<1x32x32xf32>
    %c0_16 = arith.constant 0 : index
    %c1 = arith.constant 1 : index
    %c0_17 = arith.constant 0 : index
    %c0_18 = arith.constant 0 : index
    %26 = vector.load %arg5[%c0_16, %c1, %c0_17, %c0_18] : memref<1x3x32x32xf32, #tpu.memory_space<vmem>>, vector<1x1x32x32xf32>
    %27 = vector.shape_cast %26 : vector<1x1x32x32xf32> to vector<1x32x32xf32>
    %28 = vector.shape_cast %25 : vector<1x32x32xf32> to vector<1x1x32x32xf32>
    tpu.vector_store %arg5[%c0_16, %c1, %c0_17, %c0_18], %28 {strides = array<i32>} : memref<1x3x32x32xf32, #tpu.memory_space<vmem>>, vector<1x1x32x32xf32>,
    %29 = vector.extract_strided_slice %10 {offsets = [0, 2, 0, 0], sizes = [1, 1, 32, 32], strides = [1, 1, 1, 1]} : vector<1x3x32x32xf32> to vector<1x1x32x32xf32>
    %30 = vector.shape_cast %29 : vector<1x1x32x32xf32> to vector<1x32x32xf32>
    %cst_19 = arith.constant 4.44444466 : f32
    %31 = vector.broadcast %cst_19 : f32 to vector<1x32x32xf32>
    %32 = arith.mulf %30, %31 : vector<1x32x32xf32>
    %cst_20 = arith.constant -1.80444443 : f32
    %33 = vector.broadcast %cst_20 : f32 to vector<1x32x32xf32>
    %34 = arith.addf %32, %33 : vector<1x32x32xf32>
    %c0_21 = arith.constant 0 : index
    %c2 = arith.constant 2 : index
    %c0_22 = arith.constant 0 : index
    %c0_23 = arith.constant 0 : index
    %35 = vector.load %arg5[%c0_21, %c2, %c0_22, %c0_23] : memref<1x3x32x32xf32, #tpu.memory_space<vmem>>, vector<1x1x32x32xf32>
    %36 = vector.shape_cast %35 : vector<1x1x32x32xf32> to vector<1x32x32xf32>
    %37 = vector.shape_cast %34 : vector<1x32x32xf32> to vector<1x1x32x32xf32>
    tpu.vector_store %arg5[%c0_21, %c2, %c0_22, %c0_23], %37 {strides = array<i32>} : memref<1x3x32x32xf32, #tpu.memory_space<vmem>>, vector<1x1x32x32xf32>,
    return
  }
  func.func @transform_0(%arg0: i32, %arg1: i32) -> (i32, i32, i32, i32) {
    %c0_i32 = arith.constant 0 : i32
    %c0_i32_0 = arith.constant 0 : i32
    %c0_i32_1 = arith.constant 0 : i32
    %c0_i32_2 = arith.constant 0 : i32
    return %arg0, %c0_i32, %c0_i32_0, %c0_i32_1 : i32, i32, i32, i32
  }
  func.func @transform_1(%arg0: i32, %arg1: i32) -> (i32, i32) {
    %c0_i32 = arith.constant 0 : i32
    %c0_i32_0 = arith.constant 0 : i32
    return %arg1, %c0_i32 : i32, i32
  }
  func.func @transform_2(%arg0: i32, %arg1: i32) -> (i32, i32) {
    %c0_i32 = arith.constant 0 : i32
    %c0_i32_0 = arith.constant 0 : i32
    %c0_i32_1 = arith.constant 0 : i32
    return %c0_i32, %c0_i32_0 : i32, i32
  }
  func.func @transform_3(%arg0: i32, %arg1: i32) -> (i32, i32, i32, i32) {
    %c0_i32 = arith.constant 0 : i32
    %c0_i32_0 = arith.constant 0 : i32
    %c0_i32_1 = arith.constant 0 : i32
    return %arg0, %c0_i32, %arg1, %c0_i32_0 : i32, i32, i32, i32
  }
}

</mosaic_0001>

<llo_original>
// kernel: tpu_custom_call.1
$region0: #{tpu_custom_call.1}
  #allocation0 [shape = 'u32[]', space=smem, size = 0x4, offset = 0x4, fixed_abs, tag = 'smem constant byte address 0x4 - core index']
  #allocation1 [shape = 'u32[72,128]{1,0:T(1,128)}', space=vmem, size = 0x9000, scoped, tag = 'internal scratch']
  %s0 = inlined_call_operand.hbm [shape: f32[2,3,16,16], index: 0, kind: input, shape index: {}]
  %s1 = inlined_call_operand.vmem [shape: bf16[32,16], index: 1, kind: input, shape index: {}]
  %s2 = inlined_call_operand.vmem [shape: bf16[16,32], index: 2, kind: input, shape index: {}]
  %s3 = inlined_call_operand.hbm [shape: f32[2,3,32,32], index: 3, kind: output, shape index: {}]
  %s4 = sld [smem:[#allocation0]]
  $region49: #{tpu_custom_call.1} parent=0
    _
  %s6 = ssub.s32 1, %s4
  %s7 = scalar_select 0, %s6, %s4
  $region1: #{tpu_custom_call.1} parent=0
    #allocation2 [shape = 'u8[49152]{0}', space=vmem, size = 0xc000, scoped, tag = 'input window, operand 0']
    #allocation3 [shape = 's32[2]{0}', space=sflag, size = 0x8, scoped, tag = 'scoped memory for tpu_custom_call.1']
    #allocation4 [shape = 's32[2]{0}', space=sflag, size = 0x8, scoped, tag = 'scoped memory for tpu_custom_call.1']
    #allocation5 [shape = 'u8[98304]{0}', space=vmem, size = 0x18000, scoped, tag = 'output window, operand 0']
    %8 = vsyncpa [#allocation3], 0
    %s9 = scalar_lea.sflag [#allocation3], 1
    %10 = vsyncpa %s9, 0
    %11 = vsyncpa [#allocation4], 0
    %s12 = scalar_lea.sflag [#allocation4], 1
    %13 = vsyncpa %s12, 0
    loop: start=0, step=1, limit=4
    $region2: #{tpu_custom_call.1} parent=1 // loop_pre_header
      _
    $region3: #{tpu_custom_call.1} parent=1 // loop_header
      %s15 = sphi 0, %s19
      %p16 = scmp.ge.s32.totalorder %s15, 4
      %s22 = sphi 0, %s34
      %s23 = sphi 0, %s30
      %s24 = sphi 0, %s22
      %s25 = sphi 0, %s23
      %s26 = sphi 0, %s24
      %s27 = sphi 0, %s25
      %s37 = sphi 0, %s39
      %s40 = sphi 0, %s37
      %s41 = sphi 0, %s40
      %s57 = sphi 0, %s41
      %s63 = sphi 0, %s65
      %s66 = sphi 0, %s63
      %s67 = sphi 0, %s66
      %s83 = sphi 0, %s67
      %s87 = sphi 0, %s87
      %s89 = sphi 0, %s87
      %s90 = sphi 0, %s89
      %s104 = sphi 0, %s90
      %s112 = sphi 0, %s114
      %s115 = sphi 0, %s112
      %s116 = sphi 0, %s115
      %s132 = sphi 0, %s116
    $region4: #{tpu_custom_call.1} parent=1 // loop_header_branch
      %18 = sbr.rel (%p16) target = $region8
    $region5: #{tpu_custom_call.1} parent=1 // loop_body
      %s20 = ssub.s32 %s15, 1
      %s21 = ssub.s32 %s15, 2
      %s28 = sadd.s32 1, %s23
      %p29 = scmp.ge.s32.totalorder %s28, 1
      %s30 = scalar_select %p29, 0, %s28
      %s31 = sadd.s32 1, %s22
      %s32 = scalar_select %p29, %s31, %s22
      %p33 = scmp.ge.s32.totalorder %s32, 2
      %s34 = scalar_select %p33, 0, %s32
      %s35 = ssub.s32 %s22, %s34
      %p36 = scmp.eq.s32.totalorder %s35, 0
      %s38 = sadd.s32 %s37, 1
      %s39 = scalar_select %p36, %s37, %s38
      %p42 = pneg %p36
      %p43 = scmp.eq.s32.totalorder %s15, 1
      %p44 = por %p42, %p43
      %p45 = scmp.ne.s32.totalorder %s37, %s40
      %p46 = scmp.eq.s32.totalorder %s15, 0
      %p47 = por %p45, %p46
      %p48 = scmp.ne.s32.totalorder %s37, %s40
      %p49 = scmp.eq.s32.totalorder %s20, 1
      %p50 = por %p48, %p49
      %p51 = scmp.ne.s32.totalorder %s40, %s41
      %p52 = scmp.eq.s32.totalorder %s20, 0
      %p53 = por %p51, %p52
      %p54 = scmp.ne.s32.totalorder %s40, %s41
      %p55 = scmp.eq.s32.totalorder %s21, 1
      %p56 = por %p54, %p55
      %p58 = scmp.ne.s32.totalorder %s41, %s57
      %p59 = scmp.eq.s32.totalorder %s21, 0
      %p60 = por %p58, %p59
      %s61 = ssub.s32 %s23, %s30
      %p62 = scmp.eq.s32.totalorder %s61, 0
      %s64 = sadd.s32 %s63, 1
      %s65 = scalar_select %p62, %s63, %s64
      %p68 = pneg %p62
      %p69 = scmp.eq.s32.totalorder %s15, 1
      %p70 = por %p68, %p69
      %p71 = scmp.ne.s32.totalorder %s63, %s66
      %p72 = scmp.eq.s32.totalorder %s15, 0
      %p73 = por %p71, %p72
      %p74 = scmp.ne.s32.totalorder %s63, %s66
      %p75 = scmp.eq.s32.totalorder %s20, 1
      %p76 = por %p74, %p75
      %p77 = scmp.ne.s32.totalorder %s66, %s67
      %p78 = scmp.eq.s32.totalorder %s20, 0
      %p79 = por %p77, %p78
      %p80 = scmp.ne.s32.totalorder %s66, %s67
      %p81 = scmp.eq.s32.totalorder %s21, 1
      %p82 = por %p80, %p81
      %p84 = scmp.ne.s32.totalorder %s67, %s83
      %p85 = scmp.eq.s32.totalorder %s21, 0
      %p86 = por %p84, %p85
      %s88 = sadd.s32 %s87, 1
      %p91 = scmp.eq.s32.totalorder %s15, 1
      %p92 = scmp.ne.s32.totalorder %s87, %s89
      %p93 = scmp.eq.s32.totalorder %s15, 0
      %p94 = por %p92, %p93
      %p95 = scmp.ne.s32.totalorder %s87, %s89
      %p96 = scmp.eq.s32.totalorder %s20, 1
      %p97 = por %p95, %p96
      %p98 = scmp.ne.s32.totalorder %s89, %s90
      %p99 = scmp.eq.s32.totalorder %s20, 0
      %p100 = por %p98, %p99
      %p101 = scmp.ne.s32.totalorder %s89, %s90
      %p102 = scmp.eq.s32.totalorder %s21, 1
      %p103 = por %p101, %p102
      %p105 = scmp.ne.s32.totalorder %s90, %s104
      %p106 = scmp.eq.s32.totalorder %s21, 0
      %p107 = por %p105, %p106
      %s108 = ssub.s32 %s22, %s34
      %s109 = ssub.s32 %s23, %s30
      %s110 = sor.u32 %s108, %s109
      %p111 = scmp.eq.s32.totalorder %s110, 0
      %s113 = sadd.s32 %s112, 1
      %s114 = scalar_select %p111, %s112, %s113
      %p117 = pneg %p111
      %p118 = scmp.eq.s32.totalorder %s15, 1
      %p119 = por %p117, %p118
      %p120 = scmp.ne.s32.totalorder %s112, %s115
      %p121 = scmp.eq.s32.totalorder %s15, 0
      %p122 = por %p120, %p121
      %p123 = scmp.ne.s32.totalorder %s112, %s115
      %p124 = scmp.eq.s32.totalorder %s20, 1
      %p125 = por %p123, %p124
      %p126 = scmp.ne.s32.totalorder %s115, %s116
      %p127 = scmp.eq.s32.totalorder %s20, 0
      %p128 = por %p126, %p127
      %p129 = scmp.ne.s32.totalorder %s115, %s116
      %p130 = scmp.eq.s32.totalorder %s21, 1
      %p131 = por %p129, %p130
      %p133 = scmp.ne.s32.totalorder %s116, %s132
      %p134 = scmp.eq.s32.totalorder %s21, 0
      %p135 = por %p133, %p134
      %p136 = scmp.le.s32.totalorder 1, %s15
      %p137 = scmp.lt.s32.totalorder %s15, 3
      %p138 = pnand %p136, %p137
      %p139 = pneg %p138
      // Predicated region
      $region9: #{tpu_custom_call.1} parent=5 // pred_check
        _
      $region10: #{tpu_custom_call.1} parent=5 // pred_check_branch
        %141 = sbr.rel (%p138) target = $region12
      $region11: #{tpu_custom_call.1} parent=5 // pred_region
        %s142 = ssub.s32 %s15, 1
        // Predicated region
        $region13: #{tpu_custom_call.1} parent=11 // pred_check
          %p143 = pneg %p79
        $region14: #{tpu_custom_call.1} parent=11 // pred_check_branch
          %145 = sbr.rel (%p143) target = $region16
        $region15: #{tpu_custom_call.1} parent=11 // pred_region
          %s146 = smul.u32 4, %s25
          %p147 = scmp.lt.s32.totalorder %s146, 3
          %s148 = scalar_select %p147, %s146, 3
          %s149 = smul.addr %s148, 4
          %s150 = scalar_lea.vmem %s1, %s149
          %s151 = smul.u32 4, %s25
        $region16: #{tpu_custom_call.1} parent=11 // pred_fallthru
          _
        // Predicated region
        $region17: #{tpu_custom_call.1} parent=11 // pred_check
          %p152 = pneg %p100
        $region18: #{tpu_custom_call.1} parent=11 // pred_check_branch
          %154 = sbr.rel (%p152) target = $region20
        $region19: #{tpu_custom_call.1} parent=11 // pred_region
          _
        $region20: #{tpu_custom_call.1} parent=11 // pred_fallthru
          _
      $region12: #{tpu_custom_call.1} parent=5 // pred_fallthru
        _
      %p155 = scmp.lt.s32.totalorder %s15, 2
      // Predicated region
      $region21: #{tpu_custom_call.1} parent=5 // pred_check
        %p156 = pneg %p155
      $region22: #{tpu_custom_call.1} parent=5 // pred_check_branch
        %158 = sbr.rel (%p156) target = $region24
      $region23: #{tpu_custom_call.1} parent=5 // pred_region
        // Predicated region
        $region25: #{tpu_custom_call.1} parent=23 // pred_check
          %p159 = pneg %p47
        $region26: #{tpu_custom_call.1} parent=23 // pred_check_branch
          %161 = sbr.rel (%p159) target = $region28
        $region27: #{tpu_custom_call.1} parent=23 // pred_region
          %s162 = sand.u32 %s37, 1
          %s163 = scalar_lea.sflag [#allocation3], %s162
          %s164 = sand.u32 %s37, 1
          %s165 = smul.addr %s164, 48
          %s166 = scalar_lea.vmem [#allocation2], %s165
          %168 = vsyncadd %s163, 0
          %s169 = smul.addr %s22, 6
          %s170 = smul.addr %s169, 8
          %s171 = scalar_lea.hbm %s0, %s170
          %s172 = sshll.u32 %s171, 4
          %s173 = int_to_ptr.hbm [resolvable:$true] %s172
          %s174 = sshll.u32 %s166, 4
          %s175 = int_to_ptr.vmem [resolvable:$true] %s174
          %180 = dma.hbm_to_vmem [thread:$0]  %s173, 768, %s175, %s163, 128, 128, 8
        $region28: #{tpu_custom_call.1} parent=23 // pred_fallthru
          _
      $region24: #{tpu_custom_call.1} parent=5 // pred_fallthru
        _
      %p181 = scmp.le.s32.totalorder 1, %s15
      %p182 = scmp.lt.s32.totalorder %s15, 3
      %p183 = pnand %p181, %p182
      %p184 = pneg %p183
      // Predicated region
      $region29: #{tpu_custom_call.1} parent=5 // pred_check
        _
      $region30: #{tpu_custom_call.1} parent=5 // pred_check_branch
        %186 = sbr.rel (%p183) target = $region32
      $region31: #{tpu_custom_call.1} parent=5 // pred_region
        %s187 = ssub.s32 %s15, 1
        %s188 = sand.u32 %s40, 1
        %s189 = scalar_lea.sflag [#allocation3], %s188
        %s190 = sand.u32 %s40, 1
        %s191 = smul.addr %s190, 48
        %s192 = scalar_lea.vmem [#allocation2], %s191
        // Predicated region
        $region33: #{tpu_custom_call.1} parent=31 // pred_check
          %p193 = pneg %p53
        $region34: #{tpu_custom_call.1} parent=31 // pred_check_branch
          %195 = sbr.rel (%p193) target = $region36
        $region35: #{tpu_custom_call.1} parent=31 // pred_region
          %197 = dma.done %s189, 768
        $region36: #{tpu_custom_call.1} parent=31 // pred_fallthru
          _
        %s198 = sand.u32 %s40, 1
        %s199 = scalar_lea.sflag [#allocation3], %s198
        %s200 = sand.u32 %s40, 1
        %s201 = smul.addr %s200, 48
        %s202 = scalar_lea.vmem [#allocation2], %s201
        %p203 = pneg %p53
        %p204 = pneg %p50
        %s205 = smul.u32 4, %s25
        %p206 = scmp.lt.s32.totalorder %s205, 3
        %s207 = scalar_select %p206, %s205, 3
        %s208 = smul.addr %s207, 4
        %s209 = scalar_lea.vmem %s1, %s208
        %p210 = pneg %p79
        %p211 = pneg %p76
        %p212 = pneg %p100
        %p213 = pneg %p97
        %p214 = pneg %p128
        %p215 = pneg %p125
        %s216 = sand.u32 %s115, 1
        %s217 = scalar_lea.sflag [#allocation4], %s216
        %s218 = sand.u32 %s115, 1
        %s219 = smul.addr %s218, 96
        %s220 = scalar_lea.vmem [#allocation5], %s219
        %s221 = smul.u32 4, %s25
        %p222 = scmp.lt.s32.totalorder %s221, 3
        %s223 = scalar_select %p222, %s221, 3
        %s224 = smul.addr %s223, 4
        %s225 = scalar_lea.vmem %s1, %s224
        %s226 = smul.u32 4, %s25
        %s227 = smul.u32 4, %s25
        %v229 = vld [vmem:[%s192] sm:$0xff]
        %v230 = vld [vmem:[%s192 + $0x8] sm:$0xff]
        %v231 = vld [vmem:[%s192 + $0x10] sm:$0xff]
        %v232 = vld [vmem:[%s192 + $0x18] sm:$0xff]
        %v233 = vld [vmem:[%s192 + $0x20] sm:$0xff]
        %v234 = vld [vmem:[%s192 + $0x28] sm:$0xff]
        %v235 = vpack.c.bf16 %v229, %v229
        %v236 = vpack.c.bf16 %v230, %v230
        %v237 = vpack.c.bf16 %v231, %v231
        %v238 = vpack.c.bf16 %v232, %v232
        %v239 = vpack.c.bf16 %v233, %v233
        %v240 = vpack.c.bf16 %v234, %v234
        %v241 = vld [vmem:[%s2] sm:$0xf]
        %v242 = vld [vmem:[%s2 + $0x4] sm:$0xf]
        %v249 = vunpack.c.l.b16 %v235
        %v250 = vunpack.c.l.b16 %v236
        %v251 = vunpack.c.l.b16 %v237
        %v252 = vunpack.c.l.b16 %v238
        %v253 = vunpack.c.l.b16 %v239
        %v254 = vunpack.c.l.b16 %v240
        %v255 = vpack.c.b16 %v250, %v249
        %v256 = vpack.c.b16 %v252, %v251
        %v257 = vpack.c.b16 %v254, %v253
        %v260 = vunpack.c.l.b16 %v241
        %v261 = vunpack.c.l.b16 %v242
        %v262 = vpack.c.b16 %v261, %v260
        %vm264 = vcmask 130048
        %v266 = vsel %vm264, %v255, 0
        %v269 = vsel %vm264, %v256, 0
        %v272 = vsel %vm264, %v257, 0
        %274 = vmatpush.bf16.msra.mxu0 0
        %275 = vmatpush.bf16.msra.mxu0 0
        %276 = vmatpush.bf16.msra.mxu0 0
        %277 = vmatpush.bf16.msra.mxu0 0
        %278 = vmatpush.bf16.msra.mxu0 0
        %279 = vmatpush.bf16.msra.mxu0 0
        %280 = vmatpush.bf16.msra.mxu0 0
        %281 = vmatpush.bf16.msra.mxu0 %v262
        %282 = vmatmul.bf16.gmra.mxu0 %v266
        %v283 = vpop.f32.mrf.mxu0
        %v284 = vadd.f32 0.0, %v283
        %v285 = vpop.f32.mrf.mxu0
        %v286 = vadd.f32 0.0, %v285
        %287 = vmatmul.bf16.gmra.mxu0 %v269
        %v288 = vpop.f32.mrf.mxu0
        %v289 = vadd.f32 0.0, %v288
        %v290 = vpop.f32.mrf.mxu0
        %v291 = vadd.f32 0.0, %v290
        %292 = vmatmul.bf16.gmra.mxu0 %v272
        %v293 = vpop.f32.mrf.mxu0
        %v294 = vadd.f32 0.0, %v293
        %v295 = vpop.f32.mrf.mxu0
        %v296 = vadd.f32 0.0, %v295
        %297 = vdwg.mxu0
        %v298 = vpack.c.bf16 %v284, %v284
        %v299 = vpack.c.bf16 %v286, %v286
        %v300 = vpack.c.bf16 %v289, %v289
        %v301 = vpack.c.bf16 %v291, %v291
        %v302 = vpack.c.bf16 %v294, %v294
        %v303 = vpack.c.bf16 %v296, %v296
        %v304 = vld [vmem:[%s225] sm:$0xf]
        %v305 = vld [vmem:[%s225 + $0x4] sm:$0xf]
        %v306 = vld [vmem:[%s225 + $0x8] sm:$0xf]
        %v307 = vld [vmem:[%s225 + $0xc] sm:$0xf]
        %v314 = vunpack.c.l.b16 %v298
        %v315 = vunpack.c.l.b16 %v299
        %v316 = vunpack.c.l.b16 %v300
        %v317 = vunpack.c.l.b16 %v301
        %v318 = vunpack.c.l.b16 %v302
        %v319 = vunpack.c.l.b16 %v303
        %v320 = vpack.c.b16 %v315, %v314
        %v321 = vpack.c.b16 %v317, %v316
        %v322 = vpack.c.b16 %v319, %v318
        %326 = vxpose.xlu0.c.b16.start [1/8] %v320, 128
        %327 = vxpose.xlu0.c.b16.cont [2/8] 0, 128
        %328 = vxpose.xlu0.c.b16.cont [3/8] 0, 128
        %329 = vxpose.xlu0.c.b16.cont [4/8] 0, 128
        %330 = vxpose.xlu0.c.b16.cont [5/8] 0, 128
        %331 = vxpose.xlu0.c.b16.cont [6/8] 0, 128
        %332 = vxpose.xlu0.c.b16.cont [7/8] 0, 128
        %333 = vxpose.xlu0.c.b16.end [8/8] 0, 128
        %v334 = vpop.trf.xlu0
        %v335 = vpop.trf.xlu0
        %v336 = vpop.trf.xlu0
        %v337 = vpop.trf.xlu0
        %v338 = vpop.trf.xlu0
        %v339 = vpop.trf.xlu0
        %v340 = vpop.trf.xlu0
        %v341 = vpop.trf.xlu0
        %342 = vxpose.xlu0.c.b16.start [1/8] %v321, 128
        %343 = vxpose.xlu0.c.b16.cont [2/8] 0, 128
        %344 = vxpose.xlu0.c.b16.cont [3/8] 0, 128
        %345 = vxpose.xlu0.c.b16.cont [4/8] 0, 128
        %346 = vxpose.xlu0.c.b16.cont [5/8] 0, 128
        %347 = vxpose.xlu0.c.b16.cont [6/8] 0, 128
        %348 = vxpose.xlu0.c.b16.cont [7/8] 0, 128
        %349 = vxpose.xlu0.c.b16.end [8/8] 0, 128
        %v350 = vpop.trf.xlu0
        %v351 = vpop.trf.xlu0
        %v352 = vpop.trf.xlu0
        %v353 = vpop.trf.xlu0
        %v354 = vpop.trf.xlu0
        %v355 = vpop.trf.xlu0
        %v356 = vpop.trf.xlu0
        %v357 = vpop.trf.xlu0
        %358 = vxpose.xlu0.c.b16.start [1/8] %v322, 128
        %359 = vxpose.xlu0.c.b16.cont [2/8] 0, 128
        %360 = vxpose.xlu0.c.b16.cont [3/8] 0, 128
        %361 = vxpose.xlu0.c.b16.cont [4/8] 0, 128
        %362 = vxpose.xlu0.c.b16.cont [5/8] 0, 128
        %363 = vxpose.xlu0.c.b16.cont [6/8] 0, 128
        %364 = vxpose.xlu0.c.b16.cont [7/8] 0, 128
        %365 = vxpose.xlu0.c.b16.end [8/8] 0, 128
        %v366 = vpop.trf.xlu0
        %v367 = vpop.trf.xlu0
        %v368 = vpop.trf.xlu0
        %v369 = vpop.trf.xlu0
        %v370 = vpop.trf.xlu0
        %v371 = vpop.trf.xlu0
        %v372 = vpop.trf.xlu0
        %v373 = vpop.trf.xlu0
        %v378 = vunpack.c.l.b16 %v304
        %v379 = vunpack.c.l.b16 %v305
        %v380 = vunpack.c.l.b16 %v306
        %v381 = vunpack.c.l.b16 %v307
        %v382 = vpack.c.b16 %v379, %v378
        %v383 = vpack.c.b16 %v381, %v380
        %v385 = vsel %vm264, %v334, 0
        %v388 = vsel %vm264, %v335, 0
        %v391 = vsel %vm264, %v350, 0
        %v394 = vsel %vm264, %v351, 0
        %v397 = vsel %vm264, %v366, 0
        %v400 = vsel %vm264, %v367, 0
        %v403 = vsel %vm264, %v382, 0
        %v406 = vsel %vm264, %v383, 0
        %408 = vmatpush.bf16.xpose.msra.mxu0 0
        %409 = vmatpush.bf16.xpose.msra.mxu0 0
        %410 = vmatpush.bf16.xpose.msra.mxu0 0
        %411 = vmatpush.bf16.xpose.msra.mxu0 0
        %412 = vmatpush.bf16.xpose.msra.mxu0 0
        %413 = vmatpush.bf16.xpose.msra.mxu0 0
        %414 = vmatpush.bf16.xpose.msra.mxu0 %v406
        %415 = vmatpush.bf16.xpose.msra.mxu0 %v403
        %416 = vmatmul.bf16.gmra.mxu0 %v385
        %v417 = vpop.f32.mrf.mxu0
        %v418 = vadd.f32 0.0, %v417
        %v419 = vpop.f32.mrf.mxu0
        %v420 = vadd.f32 0.0, %v419
        %421 = vmatmul.bf16.gmra.mxu0 %v388
        %v422 = vpop.f32.mrf.mxu0
        %v423 = vadd.f32 0.0, %v422
        %v424 = vpop.f32.mrf.mxu0
        %v425 = vadd.f32 0.0, %v424
        %426 = vmatmul.bf16.gmra.mxu0 %v391
        %v427 = vpop.f32.mrf.mxu0
        %v428 = vadd.f32 0.0, %v427
        %v429 = vpop.f32.mrf.mxu0
        %v430 = vadd.f32 0.0, %v429
        %431 = vmatmul.bf16.gmra.mxu0 %v394
        %v432 = vpop.f32.mrf.mxu0
        %v433 = vadd.f32 0.0, %v432
        %v434 = vpop.f32.mrf.mxu0
        %v435 = vadd.f32 0.0, %v434
        %436 = vmatmul.bf16.gmra.mxu0 %v397
        %v437 = vpop.f32.mrf.mxu0
        %v438 = vadd.f32 0.0, %v437
        %v439 = vpop.f32.mrf.mxu0
        %v440 = vadd.f32 0.0, %v439
        %441 = vmatmul.bf16.gmra.mxu0 %v400
        %v442 = vpop.f32.mrf.mxu0
        %v443 = vadd.f32 0.0, %v442
        %v444 = vpop.f32.mrf.mxu0
        %v445 = vadd.f32 0.0, %v444
        %446 = vdwg.mxu0
        %447 = vxpose.xlu0.b32.start [1/16] %v418, 128
        %448 = vxpose.xlu0.b32.cont [2/16] %v420, 128
        %449 = vxpose.xlu0.b32.cont [3/16] %v423, 128
        %450 = vxpose.xlu0.b32.cont [4/16] %v425, 128
        %451 = vxpose.xlu0.b32.cont [5/16] 0.0, 128
        %452 = vxpose.xlu0.b32.cont [6/16] 0.0, 128
        %453 = vxpose.xlu0.b32.cont [7/16] 0.0, 128
        %454 = vxpose.xlu0.b32.cont [8/16] 0.0, 128
        %455 = vxpose.xlu0.b32.cont [9/16] 0.0, 128
        %456 = vxpose.xlu0.b32.cont [10/16] 0.0, 128
        %457 = vxpose.xlu0.b32.cont [11/16] 0.0, 128
        %458 = vxpose.xlu0.b32.cont [12/16] 0.0, 128
        %459 = vxpose.xlu0.b32.cont [13/16] 0.0, 128
        %460 = vxpose.xlu0.b32.cont [14/16] 0.0, 128
        %461 = vxpose.xlu0.b32.cont [15/16] 0.0, 128
        %462 = vxpose.xlu0.b32.end [16/16] 0.0, 128
        %v463 = vpop.trf.xlu0
        %v464 = vpop.trf.xlu0
        %v465 = vpop.trf.xlu0
        %v466 = vpop.trf.xlu0
        %v467 = vpop.trf.xlu0
        %v468 = vpop.trf.xlu0
        %v469 = vpop.trf.xlu0
        %v470 = vpop.trf.xlu0
        %v471 = vpop.trf.xlu0
        %v472 = vpop.trf.xlu0
        %v473 = vpop.trf.xlu0
        %v474 = vpop.trf.xlu0
        %v475 = vpop.trf.xlu0
        %v476 = vpop.trf.xlu0
        %v477 = vpop.trf.xlu0
        %v478 = vpop.trf.xlu0
        %479 = vxpose.xlu0.b32.start [1/16] %v428, 128
        %480 = vxpose.xlu0.b32.cont [2/16] %v430, 128
        %481 = vxpose.xlu0.b32.cont [3/16] %v433, 128
        %482 = vxpose.xlu0.b32.cont [4/16] %v435, 128
        %483 = vxpose.xlu0.b32.cont [5/16] 0.0, 128
        %484 = vxpose.xlu0.b32.cont [6/16] 0.0, 128
        %485 = vxpose.xlu0.b32.cont [7/16] 0.0, 128
        %486 = vxpose.xlu0.b32.cont [8/16] 0.0, 128
        %487 = vxpose.xlu0.b32.cont [9/16] 0.0, 128
        %488 = vxpose.xlu0.b32.cont [10/16] 0.0, 128
        %489 = vxpose.xlu0.b32.cont [11/16] 0.0, 128
        %490 = vxpose.xlu0.b32.cont [12/16] 0.0, 128
        %491 = vxpose.xlu0.b32.cont [13/16] 0.0, 128
        %492 = vxpose.xlu0.b32.cont [14/16] 0.0, 128
        %493 = vxpose.xlu0.b32.cont [15/16] 0.0, 128
        %494 = vxpose.xlu0.b32.end [16/16] 0.0, 128
        %v495 = vpop.trf.xlu0
        %v496 = vpop.trf.xlu0
        %v497 = vpop.trf.xlu0
        %v498 = vpop.trf.xlu0
        %v499 = vpop.trf.xlu0
        %v500 = vpop.trf.xlu0
        %v501 = vpop.trf.xlu0
        %v502 = vpop.trf.xlu0
        %v503 = vpop.trf.xlu0
        %v504 = vpop.trf.xlu0
        %v505 = vpop.trf.xlu0
        %v506 = vpop.trf.xlu0
        %v507 = vpop.trf.xlu0
        %v508 = vpop.trf.xlu0
        %v509 = vpop.trf.xlu0
        %v510 = vpop.trf.xlu0
        %511 = vxpose.xlu0.b32.start [1/16] %v438, 128
        %512 = vxpose.xlu0.b32.cont [2/16] %v440, 128
        %513 = vxpose.xlu0.b32.cont [3/16] %v443, 128
        %514 = vxpose.xlu0.b32.cont [4/16] %v445, 128
        %515 = vxpose.xlu0.b32.cont [5/16] 0.0, 128
        %516 = vxpose.xlu0.b32.cont [6/16] 0.0, 128
        %517 = vxpose.xlu0.b32.cont [7/16] 0.0, 128
        %518 = vxpose.xlu0.b32.cont [8/16] 0.0, 128
        %519 = vxpose.xlu0.b32.cont [9/16] 0.0, 128
        %520 = vxpose.xlu0.b32.cont [10/16] 0.0, 128
        %521 = vxpose.xlu0.b32.cont [11/16] 0.0, 128
        %522 = vxpose.xlu0.b32.cont [12/16] 0.0, 128
        %523 = vxpose.xlu0.b32.cont [13/16] 0.0, 128
        %524 = vxpose.xlu0.b32.cont [14/16] 0.0, 128
        %525 = vxpose.xlu0.b32.cont [15/16] 0.0, 128
        %526 = vxpose.xlu0.b32.end [16/16] 0.0, 128
        %v527 = vpop.trf.xlu0
        %v528 = vpop.trf.xlu0
        %v529 = vpop.trf.xlu0
        %v530 = vpop.trf.xlu0
        %v531 = vpop.trf.xlu0
        %v532 = vpop.trf.xlu0
        %v533 = vpop.trf.xlu0
        %v534 = vpop.trf.xlu0
        %v535 = vpop.trf.xlu0
        %v536 = vpop.trf.xlu0
        %v537 = vpop.trf.xlu0
        %v538 = vpop.trf.xlu0
        %v539 = vpop.trf.xlu0
        %v540 = vpop.trf.xlu0
        %v541 = vpop.trf.xlu0
        %v542 = vpop.trf.xlu0
        %v543 = vmul.f32 %v463, 4.366812
        %v544 = vmul.f32 %v464, 4.366812
        %v545 = vmul.f32 %v465, 4.366812
        %v546 = vmul.f32 %v466, 4.366812
        %v547 = vadd.f32 %v543, -2.117904
        %v548 = vadd.f32 %v544, -2.117904
        %v549 = vadd.f32 %v545, -2.117904
        %v550 = vadd.f32 %v546, -2.117904
        %vm551 = vcmask 261120
        %552 = vst.msk [vmem:[%s220] sm:$0xff] %vm551, %v547
        %553 = vst.msk [vmem:[%s220 + $0x8] sm:$0xff] %vm551, %v548
        %554 = vst.msk [vmem:[%s220 + $0x10] sm:$0xff] %vm551, %v549
        %555 = vst.msk [vmem:[%s220 + $0x18] sm:$0xff] %vm551, %v550
        %v556 = vmul.f32 %v495, 4.464286
        %v557 = vmul.f32 %v496, 4.464286
        %v558 = vmul.f32 %v497, 4.464286
        %v559 = vmul.f32 %v498, 4.464286
        %v560 = vadd.f32 %v556, -2.0357144
        %v561 = vadd.f32 %v557, -2.0357144
        %v562 = vadd.f32 %v558, -2.0357144
        %v563 = vadd.f32 %v559, -2.0357144
        %s564 = scalar_lea.vmem %s220, 32 [#allocation5]
        %565 = vst.msk [vmem:[%s564] sm:$0xff] %vm551, %v560
        %566 = vst.msk [vmem:[%s564 + $0x8] sm:$0xff] %vm551, %v561
        %567 = vst.msk [vmem:[%s564 + $0x10] sm:$0xff] %vm551, %v562
        %568 = vst.msk [vmem:[%s564 + $0x18] sm:$0xff] %vm551, %v563
        %v569 = vmul.f32 %v527, 4.4444447
        %v570 = vmul.f32 %v528, 4.4444447
        %v571 = vmul.f32 %v529, 4.4444447
        %v572 = vmul.f32 %v530, 4.4444447
        %v573 = vadd.f32 %v569, -1.8044444
        %v574 = vadd.f32 %v570, -1.8044444
        %v575 = vadd.f32 %v571, -1.8044444
        %v576 = vadd.f32 %v572, -1.8044444
        %s577 = scalar_lea.vmem %s220, 64 [#allocation5]
        %578 = vst.msk [vmem:[%s577] sm:$0xff] %vm551, %v573
        %579 = vst.msk [vmem:[%s577 + $0x8] sm:$0xff] %vm551, %v574
        %580 = vst.msk [vmem:[%s577 + $0x10] sm:$0xff] %vm551, %v575
        %581 = vst.msk [vmem:[%s577 + $0x18] sm:$0xff] %vm551, %v576
        %s582 = sand.u32 %s115, 1
        %s583 = scalar_lea.sflag [#allocation4], %s582
        %s584 = sand.u32 %s115, 1
        %s585 = smul.addr %s584, 96
        %s586 = scalar_lea.vmem [#allocation5], %s585
        // Predicated region
        $region37: #{tpu_custom_call.1} parent=31 // pred_check
          %p587 = pneg %p125
        $region38: #{tpu_custom_call.1} parent=31 // pred_check_branch
          %589 = sbr.rel (%p587) target = $region40
        $region39: #{tpu_custom_call.1} parent=31 // pred_region
          %s590 = smul.u32 4, %s25
          %592 = vsyncadd %s583, 0
          %s593 = smul.addr %s24, 12
          %s594 = sadd.s32 %s590, %s593
          %s595 = smul.addr %s594, 8
          %s596 = scalar_lea.hbm %s3, %s595
          %s597 = sshll.u32 %s586, 4
          %s598 = int_to_ptr.vmem [resolvable:$true] %s597
          %s599 = sshll.u32 %s596, 4
          %s600 = int_to_ptr.hbm [resolvable:$true] %s599
          %605 = dma.vmem_to_hbm [thread:$0]  %s598, 1536, %s600, %s583, 128, 128, 8
        $region40: #{tpu_custom_call.1} parent=31 // pred_fallthru
          _
      $region32: #{tpu_custom_call.1} parent=5 // pred_fallthru
        _
      %p606 = scmp.le.s32.totalorder 2, %s15
      // Predicated region
      $region41: #{tpu_custom_call.1} parent=5 // pred_check
        %p607 = pneg %p606
      $region42: #{tpu_custom_call.1} parent=5 // pred_check_branch
        %609 = sbr.rel (%p607) target = $region44
      $region43: #{tpu_custom_call.1} parent=5 // pred_region
        %s610 = ssub.s32 %s15, 2
        // Predicated region
        $region45: #{tpu_custom_call.1} parent=43 // pred_check
          %p611 = pneg %p131
        $region46: #{tpu_custom_call.1} parent=43 // pred_check_branch
          %613 = sbr.rel (%p611) target = $region48
        $region47: #{tpu_custom_call.1} parent=43 // pred_region
          %s614 = sand.u32 %s116, 1
          %s615 = scalar_lea.sflag [#allocation4], %s614
          %s616 = sand.u32 %s116, 1
          %s617 = smul.addr %s616, 96
          %s618 = scalar_lea.vmem [#allocation5], %s617
          %620 = dma.done %s615, 1536
        $region48: #{tpu_custom_call.1} parent=43 // pred_fallthru
          _
      $region44: #{tpu_custom_call.1} parent=5 // pred_fallthru
        _
    $region6: #{tpu_custom_call.1} parent=1 // loop_footer
      %s19 = sadd.s32 1, %s15
    $region7: #{tpu_custom_call.1} parent=1 // loop_footer_branch
      %14 = sbr.rel target = $region3
    $region8: #{tpu_custom_call.1} parent=1 // loop_exit
      _
    %621 = vsyncpa [#allocation3], 1
    %s622 = scalar_lea.sflag [#allocation3], 1
    %623 = vsyncpa %s622, 1
    %624 = vsyncpa [#allocation4], 1
    %s625 = scalar_lea.sflag [#allocation4], 1
    %626 = vsyncpa %s625, 1

</llo_original>
